<compile_context>
chip_gen: v6e
topology: v6e:2x2x1
jax: 0.10.0
libtpu: 0.0.40
codegen_flags: <defaults>
</compile_context>

<pallas_src>
import jax
import jax.numpy as jnp
from jax.experimental import pallas as pl
from jax.experimental.pallas import tpu as pltpu

MINOR = 512                 # lane-dense minor dim (multiple of 128)
TARGET_BLOCK_BYTES = 1 << 20  # ~1 MiB blocks


def _sublane(dtype):
    # Minimum second-minor (sublane) granularity for the given dtype.
    return {4: 8, 2: 16, 1: 32}[jnp.dtype(dtype).itemsize]


def linear_kernel(w_ref, b_ref, x_ref, o_ref):
    # w_ref: SMEM (1, 1), b_ref: SMEM (1,), x_ref/o_ref: VMEM (tile, MINOR)
    w = w_ref[0, 0]
    b = b_ref[0]
    o_ref[...] = x_ref[...] * w + b


def _forward(x, w, b):
    """x: (N, 1) f32, w: (1, 1) f32, b: (1,) f32 -> (N, 1) f32."""
    n = x.shape[0]
    dtype = x.dtype
    itemsize = jnp.dtype(dtype).itemsize
    sub = _sublane(dtype)

    # Lane-dense view: rows of MINOR elements, padded only to the sublane
    # granularity (no rounding up to a whole number of tiles).
    rows = pl.cdiv(n, MINOR)
    rows_padded = ((rows + sub - 1) // sub) * sub

    # ~TARGET_BLOCK_BYTES per block, rounded down to the sublane granularity;
    # small problems collapse to a single block (tile == rows_padded).
    block_rows = max(sub, (TARGET_BLOCK_BYTES // (MINOR * itemsize)) // sub * sub)
    tile = min(block_rows, rows_padded)

    total = rows_padded * MINOR
    x_dense = jnp.pad(x.reshape(-1), (0, total - n)).reshape(rows_padded, MINOR)

    grid = (pl.cdiv(rows_padded, tile),)  # ragged last block handled by Pallas

    out_dense = pl.pallas_call(
        linear_kernel,
        out_shape=jax.ShapeDtypeStruct((rows_padded, MINOR), dtype),
        grid_spec=pltpu.PrefetchScalarGridSpec(
            num_scalar_prefetch=0,
            grid=grid,
            in_specs=[
                # scalar weight / bias live in SMEM, untiled
                pl.BlockSpec(memory_space=pltpu.MemorySpace.SMEM),
                pl.BlockSpec(memory_space=pltpu.MemorySpace.SMEM),
                # lane-dense, batch-tiled input
                pl.BlockSpec((tile, MINOR), lambda i: (i, 0)),
            ],
            out_specs=pl.BlockSpec((tile, MINOR), lambda i: (i, 0)),
        ),
        compiler_params=pltpu.CompilerParams(
            dimension_semantics=("parallel",),
            # Let XLA fuse the pad/reshape producer into the input pipeline
            # (only for the dense tensor input, not the SMEM scalars).
            allow_input_fusion=[False, False, True],
        ),
    )(w, b, x_dense)

    # Drop padding and restore the (N, 1) layout.
    return out_dense.reshape(-1)[:n].reshape(n, 1)


linear_regression_forward = jax.jit(_forward)


if __name__ == "__main__":
    key = jax.random.PRNGKey(0)
    kx, kw, kb = jax.random.split(key, 3)

    # Deterministic parameter init (nn.Linear(1,1): weight (1,1), bias (1,)),
    # mimicking PyTorch's U(-1/sqrt(fan_in), 1/sqrt(fan_in)) with fan_in=1.
    w = jax.random.uniform(kw, (1, 1), dtype=jnp.float32, minval=-1.0, maxval=1.0)
    b = jax.random.uniform(kb, (1,), dtype=jnp.float32, minval=-1.0, maxval=1.0)

    # Case 1: the shape from the original script (single-block path,
    # 100000 -> 196 lane-dense rows -> padded to 200 -> one (200, 512) block).
    N = 100000
    x = jax.random.uniform(kx, (N, 1), dtype=jnp.float32) * 10.0
    y = jax.block_until_ready(linear_regression_forward(x, w, b))
    y_ref = x @ w.T + b
    assert y.shape == (N, 1)
    assert jnp.allclose(y, y_ref, atol=1e-6, rtol=1e-6)

    # Case 2: exercises the multi-block path with a ragged last block
    # (300000 -> 586 rows -> padded to 592 -> grid of 2 tiles of 512 rows).
    N2 = 300000
    x2 = jax.random.uniform(kx, (N2, 1), dtype=jnp.float32) * 10.0
    y2 = jax.block_until_ready(linear_regression_forward(x2, w, b))
    y2_ref = x2 @ w.T + b
    assert y2.shape == (N2, 1)
    assert jnp.allclose(y2, y2_ref, atol=1e-6, rtol=1e-6)

    print("KERNEL_OK")
</pallas_src>

<mosaic_0001>
module attributes {stable_mosaic.version = 11 : i64} {
  func.func @linear_kernel(%arg0: i32, %arg1: memref<1x1xf32, #tpu.memory_space<smem>>, %arg2: memref<1xf32, #tpu.memory_space<smem>>, %arg3: memref<200x512xf32, #tpu.memory_space<vmem>>, %arg4: memref<200x512xf32, #tpu.memory_space<vmem>>) attributes {dimension_semantics = [#tpu.dimension_semantics<parallel>], iteration_bounds = array<i64: 1>, scalar_prefetch = 0 : i64, scratch_operands = 0 : i64, tpu.core_type = #tpu.core_type<tc>, window_params = [{transform_indices = @transform_0, window_bounds = array<i64: 1, 1>}, {transform_indices = @transform_1, window_bounds = array<i64: 1>}, {transform_indices = @transform_2, window_bounds = array<i64: 200, 512>}, {transform_indices = @transform_3, window_bounds = array<i64: 200, 512>}]} {
    %c0 = arith.constant 0 : index
    %c0_0 = arith.constant 0 : index
    %0 = memref.load %arg1[%c0, %c0_0] : memref<1x1xf32, #tpu.memory_space<smem>>
    %c0_1 = arith.constant 0 : index
    %1 = memref.load %arg2[%c0_1] : memref<1xf32, #tpu.memory_space<smem>>
    %c0_2 = arith.constant 0 : index
    %c0_3 = arith.constant 0 : index
    %2 = vector.load %arg3[%c0_2, %c0_3] : memref<200x512xf32, #tpu.memory_space<vmem>>, vector<200x512xf32>
    %3 = vector.broadcast %0 : f32 to vector<200x512xf32>
    %4 = arith.mulf %2, %3 : vector<200x512xf32>
    %5 = vector.broadcast %1 : f32 to vector<200x512xf32>
    %6 = arith.addf %4, %5 : vector<200x512xf32>
    %c0_4 = arith.constant 0 : index
    %c0_5 = arith.constant 0 : index
    %7 = vector.load %arg4[%c0_4, %c0_5] : memref<200x512xf32, #tpu.memory_space<vmem>>, vector<200x512xf32>
    tpu.vector_store %arg4[%c0_4, %c0_5], %6 {strides = array<i32>} : memref<200x512xf32, #tpu.memory_space<vmem>>, vector<200x512xf32>,
    return
  }
  func.func @transform_0(%arg0: i32) -> (i32, i32) {
    %c0_i32 = arith.constant 0 : i32
    %c0_i32_0 = arith.constant 0 : i32
    %c0_i32_1 = arith.constant 0 : i32
    return %c0_i32, %c0_i32_0 : i32, i32
  }
  func.func @transform_1(%arg0: i32) -> i32 {
    %c0_i32 = arith.constant 0 : i32
    %c0_i32_0 = arith.constant 0 : i32
    return %c0_i32 : i32
  }
  func.func @transform_2(%arg0: i32) -> (i32, i32) {
    %c0_i32 = arith.constant 0 : i32
    %c0_i32_0 = arith.constant 0 : i32
    return %arg0, %c0_i32 : i32, i32
  }
  func.func @transform_3(%arg0: i32) -> (i32, i32) {
    %c0_i32 = arith.constant 0 : i32
    %c0_i32_0 = arith.constant 0 : i32
    return %arg0, %c0_i32 : i32, i32
  }
}

</mosaic_0001>

<llo_original>
// kernel: _forward.1
$region0: #{_forward.1}
  #allocation0 [shape = 'u32[]', space=smem, size = 0x4, offset = 0x4, fixed_abs, tag = 'smem constant byte address 0x4 - core index']
  #allocation1 [shape = 'u32[144,128]{1,0:T(1,128)}', space=vmem, size = 0x12000, scoped, tag = 'internal scratch']
  #allocation2 [shape = 'f32[1,1]{1,0:T(1,128)S(6)}', space=smem, size = 0x200, scoped, tag = 'scoped memory for _forward.1']
  #allocation3 [shape = 'f32[1]{0:T(128)S(6)}', space=smem, size = 0x200, scoped, tag = 'scoped memory for _forward.1']
  %s0 = inlined_call_operand.<no memory space> [shape: f32[1,1], index: 0, kind: input, shape index: {}]
  %s1 = inlined_call_operand.<no memory space> [shape: f32[1], index: 1, kind: input, shape index: {}]
  %s2 = inlined_call_operand.vmem [shape: f32[200,512], index: 2, kind: input, shape index: {}]
  %s3 = inlined_call_operand.vmem [shape: f32[200,512], index: 3, kind: output, shape index: {}]
  %s4 = sld [smem:[#allocation0]]
  $region22: #{_forward.1} parent=0
    _
  %s6 = ssub.s32 1, %s4
  %s7 = scalar_select 0, %s6, %s4
  %8 = sst [smem:[#allocation2]] %s0
  %9 = sst [smem:[#allocation3]] %s1
  // Predicated region
  $region2: #{_forward.1} parent=0 // pred_check
    _
  $region3: #{_forward.1} parent=0 // pred_check_branch
    %11 = sbr.rel (0) target = $region5
  $region4: #{_forward.1} parent=0 // pred_region
    _
  $region5: #{_forward.1} parent=0 // pred_fallthru
    _
  // Predicated region
  $region6: #{_forward.1} parent=0 // pred_check
    _
  $region7: #{_forward.1} parent=0 // pred_check_branch
    %13 = sbr.rel (0) target = $region9
  $region8: #{_forward.1} parent=0 // pred_region
    _
  $region9: #{_forward.1} parent=0 // pred_fallthru
    _
  // Predicated region
  $region10: #{_forward.1} parent=0 // pred_check
    _
  $region11: #{_forward.1} parent=0 // pred_check_branch
    %15 = sbr.rel (0) target = $region13
  $region12: #{_forward.1} parent=0 // pred_region
    _
  $region13: #{_forward.1} parent=0 // pred_fallthru
    _
  %s16 = sld [smem:[#allocation2]]
  %s17 = sld [smem:[#allocation3]]
  %v18 = vld [vmem:[%s2] sm:$0xff]
  %v19 = vld [vmem:[%s2 + $0x8] sm:$0xff]
  %v20 = vld [vmem:[%s2 + $0x10] sm:$0xff]
  %v21 = vld [vmem:[%s2 + $0x18] sm:$0xff]
  %v22 = vld [vmem:[%s2 + $0x20] sm:$0xff]
  %v23 = vld [vmem:[%s2 + $0x28] sm:$0xff]
  %v24 = vld [vmem:[%s2 + $0x30] sm:$0xff]
  %v25 = vld [vmem:[%s2 + $0x38] sm:$0xff]
  %v26 = vld [vmem:[%s2 + $0x40] sm:$0xff]
  %v27 = vld [vmem:[%s2 + $0x48] sm:$0xff]
  %v28 = vld [vmem:[%s2 + $0x50] sm:$0xff]
  %v29 = vld [vmem:[%s2 + $0x58] sm:$0xff]
  %v30 = vld [vmem:[%s2 + $0x60] sm:$0xff]
  %v31 = vld [vmem:[%s2 + $0x68] sm:$0xff]
  %v32 = vld [vmem:[%s2 + $0x70] sm:$0xff]
  %v33 = vld [vmem:[%s2 + $0x78] sm:$0xff]
  %v34 = vld [vmem:[%s2 + $0x80] sm:$0xff]
  %v35 = vld [vmem:[%s2 + $0x88] sm:$0xff]
  %v36 = vld [vmem:[%s2 + $0x90] sm:$0xff]
  %v37 = vld [vmem:[%s2 + $0x98] sm:$0xff]
  %v38 = vld [vmem:[%s2 + $0xa0] sm:$0xff]
  %v39 = vld [vmem:[%s2 + $0xa8] sm:$0xff]
  %v40 = vld [vmem:[%s2 + $0xb0] sm:$0xff]
  %v41 = vld [vmem:[%s2 + $0xb8] sm:$0xff]
  %v42 = vld [vmem:[%s2 + $0xc0] sm:$0xff]
  %v43 = vld [vmem:[%s2 + $0xc8] sm:$0xff]
  %v44 = vld [vmem:[%s2 + $0xd0] sm:$0xff]
  %v45 = vld [vmem:[%s2 + $0xd8] sm:$0xff]
  %v46 = vld [vmem:[%s2 + $0xe0] sm:$0xff]
  %v47 = vld [vmem:[%s2 + $0xe8] sm:$0xff]
  %v48 = vld [vmem:[%s2 + $0xf0] sm:$0xff]
  %v49 = vld [vmem:[%s2 + $0xf8] sm:$0xff]
  %v50 = vld [vmem:[%s2 + $0x100] sm:$0xff]
  %v51 = vld [vmem:[%s2 + $0x108] sm:$0xff]
  %v52 = vld [vmem:[%s2 + $0x110] sm:$0xff]
  %v53 = vld [vmem:[%s2 + $0x118] sm:$0xff]
  %v54 = vld [vmem:[%s2 + $0x120] sm:$0xff]
  %v55 = vld [vmem:[%s2 + $0x128] sm:$0xff]
  %v56 = vld [vmem:[%s2 + $0x130] sm:$0xff]
  %v57 = vld [vmem:[%s2 + $0x138] sm:$0xff]
  %v58 = vld [vmem:[%s2 + $0x140] sm:$0xff]
  %v59 = vld [vmem:[%s2 + $0x148] sm:$0xff]
  %v60 = vld [vmem:[%s2 + $0x150] sm:$0xff]
  %v61 = vld [vmem:[%s2 + $0x158] sm:$0xff]
  %v62 = vld [vmem:[%s2 + $0x160] sm:$0xff]
  %v63 = vld [vmem:[%s2 + $0x168] sm:$0xff]
  %v64 = vld [vmem:[%s2 + $0x170] sm:$0xff]
  %v65 = vld [vmem:[%s2 + $0x178] sm:$0xff]
  %v66 = vld [vmem:[%s2 + $0x180] sm:$0xff]
  %v67 = vld [vmem:[%s2 + $0x188] sm:$0xff]
  %v68 = vld [vmem:[%s2 + $0x190] sm:$0xff]
  %v69 = vld [vmem:[%s2 + $0x198] sm:$0xff]
  %v70 = vld [vmem:[%s2 + $0x1a0] sm:$0xff]
  %v71 = vld [vmem:[%s2 + $0x1a8] sm:$0xff]
  %v72 = vld [vmem:[%s2 + $0x1b0] sm:$0xff]
  %v73 = vld [vmem:[%s2 + $0x1b8] sm:$0xff]
  %v74 = vld [vmem:[%s2 + $0x1c0] sm:$0xff]
  %v75 = vld [vmem:[%s2 + $0x1c8] sm:$0xff]
  %v76 = vld [vmem:[%s2 + $0x1d0] sm:$0xff]
  %v77 = vld [vmem:[%s2 + $0x1d8] sm:$0xff]
  %v78 = vld [vmem:[%s2 + $0x1e0] sm:$0xff]
  %v79 = vld [vmem:[%s2 + $0x1e8] sm:$0xff]
  %v80 = vld [vmem:[%s2 + $0x1f0] sm:$0xff]
  %v81 = vld [vmem:[%s2 + $0x1f8] sm:$0xff]
  %v82 = vld [vmem:[%s2 + $0x200] sm:$0xff]
  %v83 = vld [vmem:[%s2 + $0x208] sm:$0xff]
  %v84 = vld [vmem:[%s2 + $0x210] sm:$0xff]
  %v85 = vld [vmem:[%s2 + $0x218] sm:$0xff]
  %v86 = vld [vmem:[%s2 + $0x220] sm:$0xff]
  %v87 = vld [vmem:[%s2 + $0x228] sm:$0xff]
  %v88 = vld [vmem:[%s2 + $0x230] sm:$0xff]
  %v89 = vld [vmem:[%s2 + $0x238] sm:$0xff]
  %v90 = vld [vmem:[%s2 + $0x240] sm:$0xff]
  %v91 = vld [vmem:[%s2 + $0x248] sm:$0xff]
  %v92 = vld [vmem:[%s2 + $0x250] sm:$0xff]
  %v93 = vld [vmem:[%s2 + $0x258] sm:$0xff]
  %v94 = vld [vmem:[%s2 + $0x260] sm:$0xff]
  %v95 = vld [vmem:[%s2 + $0x268] sm:$0xff]
  %v96 = vld [vmem:[%s2 + $0x270] sm:$0xff]
  %v97 = vld [vmem:[%s2 + $0x278] sm:$0xff]
  %v98 = vld [vmem:[%s2 + $0x280] sm:$0xff]
  %v99 = vld [vmem:[%s2 + $0x288] sm:$0xff]
  %v100 = vld [vmem:[%s2 + $0x290] sm:$0xff]
  %v101 = vld [vmem:[%s2 + $0x298] sm:$0xff]
  %v102 = vld [vmem:[%s2 + $0x2a0] sm:$0xff]
  %v103 = vld [vmem:[%s2 + $0x2a8] sm:$0xff]
  %v104 = vld [vmem:[%s2 + $0x2b0] sm:$0xff]
  %v105 = vld [vmem:[%s2 + $0x2b8] sm:$0xff]
  %v106 = vld [vmem:[%s2 + $0x2c0] sm:$0xff]
  %v107 = vld [vmem:[%s2 + $0x2c8] sm:$0xff]
  %v108 = vld [vmem:[%s2 + $0x2d0] sm:$0xff]
  %v109 = vld [vmem:[%s2 + $0x2d8] sm:$0xff]
  %v110 = vld [vmem:[%s2 + $0x2e0] sm:$0xff]
  %v111 = vld [vmem:[%s2 + $0x2e8] sm:$0xff]
  %v112 = vld [vmem:[%s2 + $0x2f0] sm:$0xff]
  %v113 = vld [vmem:[%s2 + $0x2f8] sm:$0xff]
  %v114 = vld [vmem:[%s2 + $0x300] sm:$0xff]
  %v115 = vld [vmem:[%s2 + $0x308] sm:$0xff]
  %v116 = vld [vmem:[%s2 + $0x310] sm:$0xff]
  %v117 = vld [vmem:[%s2 + $0x318] sm:$0xff]
  %v118 = vstv %s16
  %v119 = vmul.f32 %v18, %v118
  %v120 = vmul.f32 %v19, %v118
  %v121 = vmul.f32 %v20, %v118
  %v122 = vmul.f32 %v21, %v118
  %v123 = vmul.f32 %v22, %v118
  %v124 = vmul.f32 %v23, %v118
  %v125 = vmul.f32 %v24, %v118
  %v126 = vmul.f32 %v25, %v118
  %v127 = vmul.f32 %v26, %v118
  %v128 = vmul.f32 %v27, %v118
  %v129 = vmul.f32 %v28, %v118
  %v130 = vmul.f32 %v29, %v118
  %v131 = vmul.f32 %v30, %v118
  %v132 = vmul.f32 %v31, %v118
  %v133 = vmul.f32 %v32, %v118
  %v134 = vmul.f32 %v33, %v118
  %v135 = vmul.f32 %v34, %v118
  %v136 = vmul.f32 %v35, %v118
  %v137 = vmul.f32 %v36, %v118
  %v138 = vmul.f32 %v37, %v118
  %v139 = vmul.f32 %v38, %v118
  %v140 = vmul.f32 %v39, %v118
  %v141 = vmul.f32 %v40, %v118
  %v142 = vmul.f32 %v41, %v118
  %v143 = vmul.f32 %v42, %v118
  %v144 = vmul.f32 %v43, %v118
  %v145 = vmul.f32 %v44, %v118
  %v146 = vmul.f32 %v45, %v118
  %v147 = vmul.f32 %v46, %v118
  %v148 = vmul.f32 %v47, %v118
  %v149 = vmul.f32 %v48, %v118
  %v150 = vmul.f32 %v49, %v118
  %v151 = vmul.f32 %v50, %v118
  %v152 = vmul.f32 %v51, %v118
  %v153 = vmul.f32 %v52, %v118
  %v154 = vmul.f32 %v53, %v118
  %v155 = vmul.f32 %v54, %v118
  %v156 = vmul.f32 %v55, %v118
  %v157 = vmul.f32 %v56, %v118
  %v158 = vmul.f32 %v57, %v118
  %v159 = vmul.f32 %v58, %v118
  %v160 = vmul.f32 %v59, %v118
  %v161 = vmul.f32 %v60, %v118
  %v162 = vmul.f32 %v61, %v118
  %v163 = vmul.f32 %v62, %v118
  %v164 = vmul.f32 %v63, %v118
  %v165 = vmul.f32 %v64, %v118
  %v166 = vmul.f32 %v65, %v118
  %v167 = vmul.f32 %v66, %v118
  %v168 = vmul.f32 %v67, %v118
  %v169 = vmul.f32 %v68, %v118
  %v170 = vmul.f32 %v69, %v118
  %v171 = vmul.f32 %v70, %v118
  %v172 = vmul.f32 %v71, %v118
  %v173 = vmul.f32 %v72, %v118
  %v174 = vmul.f32 %v73, %v118
  %v175 = vmul.f32 %v74, %v118
  %v176 = vmul.f32 %v75, %v118
  %v177 = vmul.f32 %v76, %v118
  %v178 = vmul.f32 %v77, %v118
  %v179 = vmul.f32 %v78, %v118
  %v180 = vmul.f32 %v79, %v118
  %v181 = vmul.f32 %v80, %v118
  %v182 = vmul.f32 %v81, %v118
  %v183 = vmul.f32 %v82, %v118
  %v184 = vmul.f32 %v83, %v118
  %v185 = vmul.f32 %v84, %v118
  %v186 = vmul.f32 %v85, %v118
  %v187 = vmul.f32 %v86, %v118
  %v188 = vmul.f32 %v87, %v118
  %v189 = vmul.f32 %v88, %v118
  %v190 = vmul.f32 %v89, %v118
  %v191 = vmul.f32 %v90, %v118
  %v192 = vmul.f32 %v91, %v118
  %v193 = vmul.f32 %v92, %v118
  %v194 = vmul.f32 %v93, %v118
  %v195 = vmul.f32 %v94, %v118
  %v196 = vmul.f32 %v95, %v118
  %v197 = vmul.f32 %v96, %v118
  %v198 = vmul.f32 %v97, %v118
  %v199 = vmul.f32 %v98, %v118
  %v200 = vmul.f32 %v99, %v118
  %v201 = vmul.f32 %v100, %v118
  %v202 = vmul.f32 %v101, %v118
  %v203 = vmul.f32 %v102, %v118
  %v204 = vmul.f32 %v103, %v118
  %v205 = vmul.f32 %v104, %v118
  %v206 = vmul.f32 %v105, %v118
  %v207 = vmul.f32 %v106, %v118
  %v208 = vmul.f32 %v107, %v118
  %v209 = vmul.f32 %v108, %v118
  %v210 = vmul.f32 %v109, %v118
  %v211 = vmul.f32 %v110, %v118
  %v212 = vmul.f32 %v111, %v118
  %v213 = vmul.f32 %v112, %v118
  %v214 = vmul.f32 %v113, %v118
  %v215 = vmul.f32 %v114, %v118
  %v216 = vmul.f32 %v115, %v118
  %v217 = vmul.f32 %v116, %v118
  %v218 = vmul.f32 %v117, %v118
  %v219 = vstv %s17
  %v220 = vadd.f32 %v119, %v219
  %v221 = vadd.f32 %v120, %v219
  %v222 = vadd.f32 %v121, %v219
  %v223 = vadd.f32 %v122, %v219
  %v224 = vadd.f32 %v123, %v219
  %v225 = vadd.f32 %v124, %v219
  %v226 = vadd.f32 %v125, %v219
  %v227 = vadd.f32 %v126, %v219
  %v228 = vadd.f32 %v127, %v219
  %v229 = vadd.f32 %v128, %v219
  %v230 = vadd.f32 %v129, %v219
  %v231 = vadd.f32 %v130, %v219
  %v232 = vadd.f32 %v131, %v219
  %v233 = vadd.f32 %v132, %v219
  %v234 = vadd.f32 %v133, %v219
  %v235 = vadd.f32 %v134, %v219
  %v236 = vadd.f32 %v135, %v219
  %v237 = vadd.f32 %v136, %v219
  %v238 = vadd.f32 %v137, %v219
  %v239 = vadd.f32 %v138, %v219
  %v240 = vadd.f32 %v139, %v219
  %v241 = vadd.f32 %v140, %v219
  %v242 = vadd.f32 %v141, %v219
  %v243 = vadd.f32 %v142, %v219
  %v244 = vadd.f32 %v143, %v219
  %v245 = vadd.f32 %v144, %v219
  %v246 = vadd.f32 %v145, %v219
  %v247 = vadd.f32 %v146, %v219
  %v248 = vadd.f32 %v147, %v219
  %v249 = vadd.f32 %v148, %v219
  %v250 = vadd.f32 %v149, %v219
  %v251 = vadd.f32 %v150, %v219
  %v252 = vadd.f32 %v151, %v219
  %v253 = vadd.f32 %v152, %v219
  %v254 = vadd.f32 %v153, %v219
  %v255 = vadd.f32 %v154, %v219
  %v256 = vadd.f32 %v155, %v219
  %v257 = vadd.f32 %v156, %v219
  %v258 = vadd.f32 %v157, %v219
  %v259 = vadd.f32 %v158, %v219
  %v260 = vadd.f32 %v159, %v219
  %v261 = vadd.f32 %v160, %v219
  %v262 = vadd.f32 %v161, %v219
  %v263 = vadd.f32 %v162, %v219
  %v264 = vadd.f32 %v163, %v219
  %v265 = vadd.f32 %v164, %v219
  %v266 = vadd.f32 %v165, %v219
  %v267 = vadd.f32 %v166, %v219
  %v268 = vadd.f32 %v167, %v219
  %v269 = vadd.f32 %v168, %v219
  %v270 = vadd.f32 %v169, %v219
  %v271 = vadd.f32 %v170, %v219
  %v272 = vadd.f32 %v171, %v219
  %v273 = vadd.f32 %v172, %v219
  %v274 = vadd.f32 %v173, %v219
  %v275 = vadd.f32 %v174, %v219
  %v276 = vadd.f32 %v175, %v219
  %v277 = vadd.f32 %v176, %v219
  %v278 = vadd.f32 %v177, %v219
  %v279 = vadd.f32 %v178, %v219
  %v280 = vadd.f32 %v179, %v219
  %v281 = vadd.f32 %v180, %v219
  %v282 = vadd.f32 %v181, %v219
  %v283 = vadd.f32 %v182, %v219
  %v284 = vadd.f32 %v183, %v219
  %v285 = vadd.f32 %v184, %v219
  %v286 = vadd.f32 %v185, %v219
  %v287 = vadd.f32 %v186, %v219
  %v288 = vadd.f32 %v187, %v219
  %v289 = vadd.f32 %v188, %v219
  %v290 = vadd.f32 %v189, %v219
  %v291 = vadd.f32 %v190, %v219
  %v292 = vadd.f32 %v191, %v219
  %v293 = vadd.f32 %v192, %v219
  %v294 = vadd.f32 %v193, %v219
  %v295 = vadd.f32 %v194, %v219
  %v296 = vadd.f32 %v195, %v219
  %v297 = vadd.f32 %v196, %v219
  %v298 = vadd.f32 %v197, %v219
  %v299 = vadd.f32 %v198, %v219
  %v300 = vadd.f32 %v199, %v219
  %v301 = vadd.f32 %v200, %v219
  %v302 = vadd.f32 %v201, %v219
  %v303 = vadd.f32 %v202, %v219
  %v304 = vadd.f32 %v203, %v219
  %v305 = vadd.f32 %v204, %v219
  %v306 = vadd.f32 %v205, %v219
  %v307 = vadd.f32 %v206, %v219
  %v308 = vadd.f32 %v207, %v219
  %v309 = vadd.f32 %v208, %v219
  %v310 = vadd.f32 %v209, %v219
  %v311 = vadd.f32 %v210, %v219
  %v312 = vadd.f32 %v211, %v219
  %v313 = vadd.f32 %v212, %v219
  %v314 = vadd.f32 %v213, %v219
  %v315 = vadd.f32 %v214, %v219
  %v316 = vadd.f32 %v215, %v219
  %v317 = vadd.f32 %v216, %v219
  %v318 = vadd.f32 %v217, %v219
  %v319 = vadd.f32 %v218, %v219
  %320 = vst [vmem:[%s3] sm:$0xff] %v220
  %321 = vst [vmem:[%s3 + $0x8] sm:$0xff] %v221
  %322 = vst [vmem:[%s3 + $0x10] sm:$0xff] %v222
  %323 = vst [vmem:[%s3 + $0x18] sm:$0xff] %v223
  %324 = vst [vmem:[%s3 + $0x20] sm:$0xff] %v224
  %325 = vst [vmem:[%s3 + $0x28] sm:$0xff] %v225
  %326 = vst [vmem:[%s3 + $0x30] sm:$0xff] %v226
  %327 = vst [vmem:[%s3 + $0x38] sm:$0xff] %v227
  %328 = vst [vmem:[%s3 + $0x40] sm:$0xff] %v228
  %329 = vst [vmem:[%s3 + $0x48] sm:$0xff] %v229
  %330 = vst [vmem:[%s3 + $0x50] sm:$0xff] %v230
  %331 = vst [vmem:[%s3 + $0x58] sm:$0xff] %v231
  %332 = vst [vmem:[%s3 + $0x60] sm:$0xff] %v232
  %333 = vst [vmem:[%s3 + $0x68] sm:$0xff] %v233
  %334 = vst [vmem:[%s3 + $0x70] sm:$0xff] %v234
  %335 = vst [vmem:[%s3 + $0x78] sm:$0xff] %v235
  %336 = vst [vmem:[%s3 + $0x80] sm:$0xff] %v236
  %337 = vst [vmem:[%s3 + $0x88] sm:$0xff] %v237
  %338 = vst [vmem:[%s3 + $0x90] sm:$0xff] %v238
  %339 = vst [vmem:[%s3 + $0x98] sm:$0xff] %v239
  %340 = vst [vmem:[%s3 + $0xa0] sm:$0xff] %v240
  %341 = vst [vmem:[%s3 + $0xa8] sm:$0xff] %v241
  %342 = vst [vmem:[%s3 + $0xb0] sm:$0xff] %v242
  %343 = vst [vmem:[%s3 + $0xb8] sm:$0xff] %v243
  %344 = vst [vmem:[%s3 + $0xc0] sm:$0xff] %v244
  %345 = vst [vmem:[%s3 + $0xc8] sm:$0xff] %v245
  %346 = vst [vmem:[%s3 + $0xd0] sm:$0xff] %v246
  %347 = vst [vmem:[%s3 + $0xd8] sm:$0xff] %v247
  %348 = vst [vmem:[%s3 + $0xe0] sm:$0xff] %v248
  %349 = vst [vmem:[%s3 + $0xe8] sm:$0xff] %v249
  %350 = vst [vmem:[%s3 + $0xf0] sm:$0xff] %v250
  %351 = vst [vmem:[%s3 + $0xf8] sm:$0xff] %v251
  %352 = vst [vmem:[%s3 + $0x100] sm:$0xff] %v252
  %353 = vst [vmem:[%s3 + $0x108] sm:$0xff] %v253
  %354 = vst [vmem:[%s3 + $0x110] sm:$0xff] %v254
  %355 = vst [vmem:[%s3 + $0x118] sm:$0xff] %v255
  %356 = vst [vmem:[%s3 + $0x120] sm:$0xff] %v256
  %357 = vst [vmem:[%s3 + $0x128] sm:$0xff] %v257
  %358 = vst [vmem:[%s3 + $0x130] sm:$0xff] %v258
  %359 = vst [vmem:[%s3 + $0x138] sm:$0xff] %v259
  %360 = vst [vmem:[%s3 + $0x140] sm:$0xff] %v260
  %361 = vst [vmem:[%s3 + $0x148] sm:$0xff] %v261
  %362 = vst [vmem:[%s3 + $0x150] sm:$0xff] %v262
  %363 = vst [vmem:[%s3 + $0x158] sm:$0xff] %v263
  %364 = vst [vmem:[%s3 + $0x160] sm:$0xff] %v264
  %365 = vst [vmem:[%s3 + $0x168] sm:$0xff] %v265
  %366 = vst [vmem:[%s3 + $0x170] sm:$0xff] %v266
  %367 = vst [vmem:[%s3 + $0x178] sm:$0xff] %v267
  %368 = vst [vmem:[%s3 + $0x180] sm:$0xff] %v268
  %369 = vst [vmem:[%s3 + $0x188] sm:$0xff] %v269
  %370 = vst [vmem:[%s3 + $0x190] sm:$0xff] %v270
  %371 = vst [vmem:[%s3 + $0x198] sm:$0xff] %v271
  %372 = vst [vmem:[%s3 + $0x1a0] sm:$0xff] %v272
  %373 = vst [vmem:[%s3 + $0x1a8] sm:$0xff] %v273
  %374 = vst [vmem:[%s3 + $0x1b0] sm:$0xff] %v274
  %375 = vst [vmem:[%s3 + $0x1b8] sm:$0xff] %v275
  %376 = vst [vmem:[%s3 + $0x1c0] sm:$0xff] %v276
  %377 = vst [vmem:[%s3 + $0x1c8] sm:$0xff] %v277
  %378 = vst [vmem:[%s3 + $0x1d0] sm:$0xff] %v278
  %379 = vst [vmem:[%s3 + $0x1d8] sm:$0xff] %v279
  %380 = vst [vmem:[%s3 + $0x1e0] sm:$0xff] %v280
  %381 = vst [vmem:[%s3 + $0x1e8] sm:$0xff] %v281
  %382 = vst [vmem:[%s3 + $0x1f0] sm:$0xff] %v282
  %383 = vst [vmem:[%s3 + $0x1f8] sm:$0xff] %v283
  %384 = vst [vmem:[%s3 + $0x200] sm:$0xff] %v284
  %385 = vst [vmem:[%s3 + $0x208] sm:$0xff] %v285
  %386 = vst [vmem:[%s3 + $0x210] sm:$0xff] %v286
  %387 = vst [vmem:[%s3 + $0x218] sm:$0xff] %v287
  %388 = vst [vmem:[%s3 + $0x220] sm:$0xff] %v288
  %389 = vst [vmem:[%s3 + $0x228] sm:$0xff] %v289
  %390 = vst [vmem:[%s3 + $0x230] sm:$0xff] %v290
  %391 = vst [vmem:[%s3 + $0x238] sm:$0xff] %v291
  %392 = vst [vmem:[%s3 + $0x240] sm:$0xff] %v292
  %393 = vst [vmem:[%s3 + $0x248] sm:$0xff] %v293
  %394 = vst [vmem:[%s3 + $0x250] sm:$0xff] %v294
  %395 = vst [vmem:[%s3 + $0x258] sm:$0xff] %v295
  %396 = vst [vmem:[%s3 + $0x260] sm:$0xff] %v296
  %397 = vst [vmem:[%s3 + $0x268] sm:$0xff] %v297
  %398 = vst [vmem:[%s3 + $0x270] sm:$0xff] %v298
  %399 = vst [vmem:[%s3 + $0x278] sm:$0xff] %v299
  %400 = vst [vmem:[%s3 + $0x280] sm:$0xff] %v300
  %401 = vst [vmem:[%s3 + $0x288] sm:$0xff] %v301
  %402 = vst [vmem:[%s3 + $0x290] sm:$0xff] %v302
  %403 = vst [vmem:[%s3 + $0x298] sm:$0xff] %v303
  %404 = vst [vmem:[%s3 + $0x2a0] sm:$0xff] %v304
  %405 = vst [vmem:[%s3 + $0x2a8] sm:$0xff] %v305
  %406 = vst [vmem:[%s3 + $0x2b0] sm:$0xff] %v306
  %407 = vst [vmem:[%s3 + $0x2b8] sm:$0xff] %v307
  %408 = vst [vmem:[%s3 + $0x2c0] sm:$0xff] %v308
  %409 = vst [vmem:[%s3 + $0x2c8] sm:$0xff] %v309
  %410 = vst [vmem:[%s3 + $0x2d0] sm:$0xff] %v310
  %411 = vst [vmem:[%s3 + $0x2d8] sm:$0xff] %v311
  %412 = vst [vmem:[%s3 + $0x2e0] sm:$0xff] %v312
  %413 = vst [vmem:[%s3 + $0x2e8] sm:$0xff] %v313
  %414 = vst [vmem:[%s3 + $0x2f0] sm:$0xff] %v314
  %415 = vst [vmem:[%s3 + $0x2f8] sm:$0xff] %v315
  %416 = vst [vmem:[%s3 + $0x300] sm:$0xff] %v316
  %417 = vst [vmem:[%s3 + $0x308] sm:$0xff] %v317
  %418 = vst [vmem:[%s3 + $0x310] sm:$0xff] %v318
  %419 = vst [vmem:[%s3 + $0x318] sm:$0xff] %v319
  // Predicated region
  $region14: #{_forward.1} parent=0 // pred_check
    _
  $region15: #{_forward.1} parent=0 // pred_check_branch
    %421 = sbr.rel (0) target = $region17
  $region16: #{_forward.1} parent=0 // pred_region
    _
  $region17: #{_forward.1} parent=0 // pred_fallthru
    _
  // Predicated region
  $region18: #{_forward.1} parent=0 // pred_check
    _
  $region19: #{_forward.1} parent=0 // pred_check_branch
    %423 = sbr.rel (0) target = $region21
  $region20: #{_forward.1} parent=0 // pred_region
    _
  $region21: #{_forward.1} parent=0 // pred_fallthru
    _

</llo_original>
